<compile_context>
chip_gen: v5e
topology: v5e:2x2
jax: 0.10.0
libtpu: 0.0.40
codegen_flags: <defaults>
</compile_context>

<pallas_src>
import functools

import jax
import jax.numpy as jnp
from jax import lax
from jax.experimental import pallas as pl
from jax.experimental.pallas import tpu as pltpu


_BF16 = jnp.bfloat16
_F32 = jnp.float32
_INV_SQRT2 = 0.7071067811865476


def _compute_vmem_limit():
    cap = 128 * 1024 * 1024
    try:
        info = pltpu.get_tpu_info()
        cap = int(getattr(info, "vmem_capacity_bytes", cap))
    except Exception:
        pass
    # leave headroom: ~75% of physical, capped (v7x 64MiB -> 48MiB; v5e/v6e 128MiB -> 96MiB)
    return int(min(cap * 3 // 4, 96 * 1024 * 1024))


_VMEM_LIMIT = _compute_vmem_limit()
_ROW_TILE_TARGET = 512 if _VMEM_LIMIT >= 64 * 1024 * 1024 else 256
_HID_TILE_TARGET = 512


# ------------------------------------------------------------------ shared math helpers

def _gelu(x):
    # exact (erf) GELU, matching torch.nn.GELU default; f32 pointwise (v5e-safe)
    return 0.5 * x * (1.0 + lax.erf(x * _INV_SQRT2))


def _ln(x, g, b, eps=1e-6):
    # MAE-ViT blocks use LayerNorm(eps=1e-6); verify against checkpoint eps when loading.
    m = jnp.mean(x, axis=-1, keepdims=True)
    c = x - m
    v = jnp.mean(c * c, axis=-1, keepdims=True)
    return c * lax.rsqrt(v + eps) * g + b


def _pick_block(dim, gran, target):
    """Largest multiple of `gran` that divides `dim` and is <= target; else full dim."""
    if dim <= target:
        return dim
    t = (target // gran) * gran
    while t >= gran:
        if dim % t == 0:
            return t
        t -= gran
    return dim


def _dot(a_bf16, b_bf16):
    return jnp.dot(a_bf16, b_bf16, preferred_element_type=jnp.float32)


# ----------------------------------------------------------------------------- kernels

def _patch_embed_kernel(x_ref, w_ref, b_ref, pos_ref, o_ref):
    x = x_ref[0].astype(_BF16)                               # (P, patch_size)
    y = _dot(x, w_ref[...]) + b_ref[...] + pos_ref[0]        # w is bf16 in HBM already
    o_ref[0] = y.astype(o_ref.dtype)


def pallas_patch_embed(x3d, w, b, pos):
    """x3d: (B, P, patch_size) -> (B, P, D); Conv1d(k=stride=patch) as matmul + pos add."""
    B, P, ps = x3d.shape
    D = w.shape[1]
    return pl.pallas_call(
        _patch_embed_kernel,
        grid=(B,),
        in_specs=[
            pl.BlockSpec((1, P, ps), lambda i: (i, 0, 0)),
            pl.BlockSpec((ps, D), lambda i: (0, 0)),
            pl.BlockSpec((1, D), lambda i: (0, 0)),
            pl.BlockSpec((1, P, D), lambda i: (0, 0, 0)),
        ],
        out_specs=pl.BlockSpec((1, P, D), lambda i: (i, 0, 0)),
        out_shape=jax.ShapeDtypeStruct((B, P, D), _F32),
        compiler_params=pltpu.CompilerParams(
            dimension_semantics=("parallel",), vmem_limit_bytes=_VMEM_LIMIT),
    )(x3d, w, b, pos)


def _attn_block_kernel(x_ref, g_ref, beta_ref, wq_ref, wk_ref, wv_ref,
                       bq_ref, bk_ref, bv_ref, pw_ref, pb_ref, o_ref,
                       ln_sc, acc_sc, *, scale):
    h = pl.program_id(1)

    @pl.when(h == 0)
    def _():
        xf = x_ref[0].astype(_F32)
        ln_sc[...] = _ln(xf, g_ref[...], beta_ref[...]).astype(_BF16)
        acc_sc[...] = jnp.zeros_like(acc_sc)

    xn = ln_sc[...]                                          # (S, D) bf16, computed once per batch
    q = _dot(xn, wq_ref[0]) + bq_ref[0]                      # (S, Dh) f32
    k = _dot(xn, wk_ref[0]) + bk_ref[0]
    v = _dot(xn, wv_ref[0]) + bv_ref[0]

    # scores: contract last dims directly (no explicit k.T / XLU transpose)
    s = lax.dot_general(q.astype(_BF16), k.astype(_BF16),
                        (((1,), (1,)), ((), ())),
                        preferred_element_type=jnp.float32) * scale
    s = s - jnp.max(s, axis=-1, keepdims=True)
    p = jnp.exp(s)
    p = p * pl.reciprocal(jnp.sum(p, axis=-1, keepdims=True), approx=True)

    a = _dot(p.astype(_BF16), v.astype(_BF16))               # (S, Dh)
    acc_sc[...] += _dot(a.astype(_BF16), pw_ref[0])          # (S, D): per-head proj_w row slab

    @pl.when(h == pl.num_programs(1) - 1)
    def _():
        o_ref[0] = (x_ref[0].astype(_F32) + acc_sc[...] + pb_ref[...]).astype(o_ref.dtype)


def pallas_attn_block(h3d, gamma, beta, wq, wk, wv, bq, bk, bv, proj_w, proj_b, *, scale):
    """Fused LN1 + per-head QKV + attention + out-proj + residual; grid (batch, head)."""
    B, S, D = h3d.shape
    H, _, Dh = wq.shape
    return pl.pallas_call(
        functools.partial(_attn_block_kernel, scale=scale),
        grid=(B, H),
        in_specs=[
            pl.BlockSpec((1, S, D), lambda b, h: (b, 0, 0)),   # residual / LN input
            pl.BlockSpec((1, D), lambda b, h: (0, 0)),         # ln1 gamma
            pl.BlockSpec((1, D), lambda b, h: (0, 0)),         # ln1 beta
            pl.BlockSpec((1, D, Dh), lambda b, h: (h, 0, 0)),  # Wq (head-major, bf16)
            pl.BlockSpec((1, D, Dh), lambda b, h: (h, 0, 0)),  # Wk
            pl.BlockSpec((1, D, Dh), lambda b, h: (h, 0, 0)),  # Wv
            pl.BlockSpec((1, 1, Dh), lambda b, h: (h, 0, 0)),  # bq
            pl.BlockSpec((1, 1, Dh), lambda b, h: (h, 0, 0)),  # bk
            pl.BlockSpec((1, 1, Dh), lambda b, h: (h, 0, 0)),  # bv
            pl.BlockSpec((1, Dh, D), lambda b, h: (h, 0, 0)),  # proj_w row slab
            pl.BlockSpec((1, D), lambda b, h: (0, 0)),         # proj_b
        ],
        out_specs=pl.BlockSpec((1, S, D), lambda b, h: (b, 0, 0)),
        out_shape=jax.ShapeDtypeStruct((B, S, D), _F32),
        scratch_shapes=[pltpu.VMEM((S, D), _BF16),             # LN'd activations (once per b)
                        pltpu.VMEM((S, D), _F32)],             # out-proj accumulator
        compiler_params=pltpu.CompilerParams(
            dimension_semantics=("parallel", "arbitrary"),
            vmem_limit_bytes=_VMEM_LIMIT),
    )(h3d, gamma, beta, wq, wk, wv, bq, bk, bv, proj_w, proj_b)


def _mlp_block_kernel(x_ref, g_ref, beta_ref, w1_ref, b1_ref, w2_ref, b2_ref, o_ref,
                      ln_sc, acc_sc):
    j = pl.program_id(1)

    @pl.when(j == 0)
    def _():
        xf = x_ref[...].astype(_F32)
        ln_sc[...] = _ln(xf, g_ref[...], beta_ref[...]).astype(_BF16)
        acc_sc[...] = jnp.zeros_like(acc_sc)

    m = _gelu(_dot(ln_sc[...], w1_ref[...]) + b1_ref[...])    # (tm, th) f32
    acc_sc[...] += _dot(m.astype(_BF16), w2_ref[...])         # (tm, D)

    @pl.when(j == pl.num_programs(1) - 1)
    def _():
        o_ref[...] = (x_ref[...].astype(_F32) + acc_sc[...] + b2_ref[...]).astype(o_ref.dtype)


def pallas_mlp_block(x2d, gamma, beta, w1, b1, w2, b2):
    """Fused LN2 + FC1(GELU) + FC2 + residual; rows tiled, hidden dim tiled ('arbitrary')."""
    M, D = x2d.shape
    Hid = w1.shape[1]
    tm = _pick_block(M, 8, _ROW_TILE_TARGET)
    th = _pick_block(Hid, 128, _HID_TILE_TARGET)
    return pl.pallas_call(
        _mlp_block_kernel,
        grid=(M // tm, Hid // th),
        in_specs=[
            pl.BlockSpec((tm, D), lambda i, j: (i, 0)),
            pl.BlockSpec((1, D), lambda i, j: (0, 0)),
            pl.BlockSpec((1, D), lambda i, j: (0, 0)),
            pl.BlockSpec((D, th), lambda i, j: (0, j)),        # fc1 column slab (bf16)
            pl.BlockSpec((1, th), lambda i, j: (0, j)),
            pl.BlockSpec((th, D), lambda i, j: (j, 0)),        # fc2 row slab (bf16)
            pl.BlockSpec((1, D), lambda i, j: (0, 0)),
        ],
        out_specs=pl.BlockSpec((tm, D), lambda i, j: (i, 0)),
        out_shape=jax.ShapeDtypeStruct((M, D), _F32),
        scratch_shapes=[pltpu.VMEM((tm, D), _BF16),
                        pltpu.VMEM((tm, D), _F32)],
        compiler_params=pltpu.CompilerParams(
            dimension_semantics=("parallel", "arbitrary"),
            vmem_limit_bytes=_VMEM_LIMIT),
    )(x2d, gamma, beta, w1, b1, w2, b2)


def _pool_tail_kernel(x_ref, g_ref, b_ref, dw_ref, db_ref, o_ref):
    x = x_ref[0].astype(_F32)                                 # (S, D)
    m = jnp.mean(x, axis=0, keepdims=True)                    # mean pool over seq
    hn = _ln(m, g_ref[...], b_ref[...]).astype(_BF16)
    o_ref[0] = (_dot(hn, dw_ref[...]) + db_ref[...]).astype(o_ref.dtype)


def pallas_pool_tail(h3d, gamma, beta, dm_w, dm_b):
    """global_pool=True tail: mean-pool + final LN + dim_mapper in one kernel."""
    B, S, D = h3d.shape
    C = dm_w.shape[1]
    return pl.pallas_call(
        _pool_tail_kernel,
        grid=(B,),
        in_specs=[
            pl.BlockSpec((1, S, D), lambda b: (b, 0, 0)),
            pl.BlockSpec((1, D), lambda b: (0, 0)),
            pl.BlockSpec((1, D), lambda b: (0, 0)),
            pl.BlockSpec((D, C), lambda b: (0, 0)),
            pl.BlockSpec((1, C), lambda b: (0, 0)),
        ],
        out_specs=pl.BlockSpec((1, 1, C), lambda b: (b, 0, 0)),
        out_shape=jax.ShapeDtypeStruct((B, 1, C), _F32),
        compiler_params=pltpu.CompilerParams(
            dimension_semantics=("parallel",), vmem_limit_bytes=_VMEM_LIMIT),
    )(h3d, gamma, beta, dm_w, dm_b)


def _chmap_tail_kernel(x_ref, g_ref, b_ref, w1_ref, b1_ref, w2_ref, b2_ref,
                       dw_ref, db_ref, o_ref):
    x = x_ref[0].astype(_F32)                                 # (S, D)
    hn = _ln(x, g_ref[...], b_ref[...]).astype(_BF16)
    t = _dot(w1_ref[...], hn) + b1_ref[...]                   # (S//2, D)  Conv1d(S, S//2, 1)
    u = _dot(w2_ref[...], t.astype(_BF16)) + b2_ref[...]      # (77, D)    Conv1d(S//2, 77, 1)
    o_ref[0] = (_dot(u.astype(_BF16), dw_ref[...]) + db_ref[...]).astype(o_ref.dtype)


def pallas_chmap_tail(h3d, gamma, beta, cm1_w, cm1_b, cm2_w, cm2_b, dm_w, dm_b):
    """global_pool=False tail: final LN + channel_mapper (left matmuls) + dim_mapper."""
    B, S, D = h3d.shape
    S2 = cm1_w.shape[0]
    T = cm2_w.shape[0]
    C = dm_w.shape[1]
    return pl.pallas_call(
        _chmap_tail_kernel,
        grid=(B,),
        in_specs=[
            pl.BlockSpec((1, S, D), lambda b: (b, 0, 0)),
            pl.BlockSpec((1, D), lambda b: (0, 0)),
            pl.BlockSpec((1, D), lambda b: (0, 0)),
            pl.BlockSpec((S2, S), lambda b: (0, 0)),
            pl.BlockSpec((S2, 1), lambda b: (0, 0)),
            pl.BlockSpec((T, S2), lambda b: (0, 0)),
            pl.BlockSpec((T, 1), lambda b: (0, 0)),
            pl.BlockSpec((D, C), lambda b: (0, 0)),
            pl.BlockSpec((1, C), lambda b: (0, 0)),
        ],
        out_specs=pl.BlockSpec((1, T, C), lambda b: (b, 0, 0)),
        out_shape=jax.ShapeDtypeStruct((B, T, C), _F32),
        compiler_params=pltpu.CompilerParams(
            dimension_semantics=("parallel",), vmem_limit_bytes=_VMEM_LIMIT),
    )(h3d, gamma, beta, cm1_w, cm1_b, cm2_w, cm2_b, dm_w, dm_b)


# ---------------------------------------------------------------------------- reference
# pure-JAX (f32 math, same bf16-stored weights) ops with identical signatures.

def ref_patch_embed(x3d, w, b, pos):
    return x3d @ w.astype(_F32) + b + pos


def ref_attn_block(h3d, gamma, beta, wq, wk, wv, bq, bk, bv, proj_w, proj_b, *, scale):
    xn = _ln(h3d, gamma, beta)
    q = jnp.einsum("bsd,hde->bhse", xn, wq.astype(_F32)) + bq[None]
    k = jnp.einsum("bsd,hde->bhse", xn, wk.astype(_F32)) + bk[None]
    v = jnp.einsum("bsd,hde->bhse", xn, wv.astype(_F32)) + bv[None]
    s = jnp.einsum("bhqe,bhke->bhqk", q, k) * scale
    p = jax.nn.softmax(s, axis=-1)
    a = jnp.einsum("bhqk,bhke->bhqe", p, v)
    y = jnp.einsum("bhse,hed->bsd", a, proj_w.astype(_F32)) + proj_b
    return h3d + y


def ref_mlp_block(x2d, gamma, beta, w1, b1, w2, b2):
    hn = _ln(x2d, gamma, beta)
    return x2d + _gelu(hn @ w1.astype(_F32) + b1) @ w2.astype(_F32) + b2


def ref_pool_tail(h3d, gamma, beta, dm_w, dm_b):
    m = jnp.mean(h3d, axis=1, keepdims=True)
    return _ln(m, gamma, beta) @ dm_w.astype(_F32) + dm_b


def ref_chmap_tail(h3d, gamma, beta, cm1_w, cm1_b, cm2_w, cm2_b, dm_w, dm_b):
    hn = _ln(h3d, gamma, beta)
    t = jnp.einsum("cs,bsd->bcd", cm1_w.astype(_F32), hn) + cm1_b
    u = jnp.einsum("tc,bcd->btd", cm2_w.astype(_F32), t) + cm2_b
    return u @ dm_w.astype(_F32) + dm_b


PALLAS_OPS = dict(patch_embed=pallas_patch_embed, attn_block=pallas_attn_block,
                  mlp_block=pallas_mlp_block, pool_tail=pallas_pool_tail,
                  chmap_tail=pallas_chmap_tail)
REF_OPS = dict(patch_embed=ref_patch_embed, attn_block=ref_attn_block,
               mlp_block=ref_mlp_block, pool_tail=ref_pool_tail,
               chmap_tail=ref_chmap_tail)


# -------------------------------------------------------------------------- parameters

def init_params(key, *, num_voxels, patch_size, embed_dim, depth, num_heads,
                mlp_ratio, cond_dim):
    P = num_voxels // patch_size
    hidden = int(embed_dim * mlp_ratio)
    Dh = embed_dim // num_heads
    keys = iter(jax.random.split(key, 16 + 8 * depth))

    def w(shape, scale=0.02):
        return scale * jax.random.normal(next(keys), shape, _F32)

    params = {
        # PatchEmbed1D: Conv1d(1, D, k=patch_size, stride=patch_size) == (patch_size, D) linear
        "patch_w": w((patch_size, embed_dim)).astype(_BF16),
        "patch_b": w((1, embed_dim)),
        "pos_embed": w((1, P, embed_dim)),
        # final encoder LayerNorm
        "norm_g": jnp.ones((1, embed_dim), _F32),
        "norm_b": jnp.zeros((1, embed_dim), _F32),
        # channel_mapper (global_pool=False only), left-multiply (Conv1d kernel=1) form
        "cm1_w": w((P // 2, P)).astype(_BF16),
        "cm1_b": w((P // 2, 1)),
        "cm2_w": w((77, P // 2)).astype(_BF16),
        "cm2_b": w((77, 1)),
        # dim_mapper: Linear(embed_dim, cond_dim)
        "dm_w": w((embed_dim, cond_dim)).astype(_BF16),
        "dm_b": w((1, cond_dim)),
        "blocks": [],
    }
    D = embed_dim
    for _ in range(depth):
        qkv_w = w((D, 3 * D))
        qkv_b = w((3 * D,))
        proj_w = w((D, D))

        def head_major(mat):   # (D, D) columns -> (H, D, Dh)
            return mat.reshape(D, num_heads, Dh).transpose(1, 0, 2).astype(_BF16)

        params["blocks"].append({
            "ln1_g": jnp.ones((1, D), _F32),
            "ln1_b": jnp.zeros((1, D), _F32),
            "wq": head_major(qkv_w[:, 0 * D:1 * D]),
            "wk": head_major(qkv_w[:, 1 * D:2 * D]),
            "wv": head_major(qkv_w[:, 2 * D:3 * D]),
            "bq": qkv_b[0 * D:1 * D].reshape(num_heads, 1, Dh),
            "bk": qkv_b[1 * D:2 * D].reshape(num_heads, 1, Dh),
            "bv": qkv_b[2 * D:3 * D].reshape(num_heads, 1, Dh),
            "proj_w": proj_w.reshape(num_heads, Dh, D).astype(_BF16),   # row slab per head
            "proj_b": w((1, D)),
            "ln2_g": jnp.ones((1, D), _F32),
            "ln2_b": jnp.zeros((1, D), _F32),
            "fc1_w": w((D, hidden)).astype(_BF16),
            "fc1_b": w((1, hidden)),
            "fc2_w": w((hidden, D)).astype(_BF16),
            "fc2_b": w((1, D)),
        })
    return params


# ----------------------------------------------------------------------------- forward

def cond_stage_forward(params, x, *, num_heads, global_pool, ops):
    """x: (B, 1, num_voxels) (PyTorch NCL). Returns (B, 77, cond_dim) or (B, 1, cond_dim)."""
    B = x.shape[0]
    V = x.shape[-1]
    pos = params["pos_embed"]
    P, D = pos.shape[1], pos.shape[2]
    patch_size = V // P
    scale = (D // num_heads) ** -0.5

    # --- MAE encoder ---
    xp = x.reshape(B, P, patch_size)                          # per-patch view (contiguous)
    h = ops["patch_embed"](xp, params["patch_w"], params["patch_b"], pos)   # (B, P, D)
    S = P

    for blk in params["blocks"]:
        h = ops["attn_block"](h, blk["ln1_g"], blk["ln1_b"],
                              blk["wq"], blk["wk"], blk["wv"],
                              blk["bq"], blk["bk"], blk["bv"],
                              blk["proj_w"], blk["proj_b"], scale=scale)
        h = ops["mlp_block"](h.reshape(B * S, D), blk["ln2_g"], blk["ln2_b"],
                             blk["fc1_w"], blk["fc1_b"],
                             blk["fc2_w"], blk["fc2_b"]).reshape(B, S, D)

    # --- pooling / final norm / channel_mapper / dim_mapper (fused tails) ---
    if global_pool:
        out = ops["pool_tail"](h, params["norm_g"], params["norm_b"],
                               params["dm_w"], params["dm_b"])              # (B, 1, C)
    else:
        out = ops["chmap_tail"](h, params["norm_g"], params["norm_b"],
                                params["cm1_w"], params["cm1_b"],
                                params["cm2_w"], params["cm2_b"],
                                params["dm_w"], params["dm_b"])             # (B, 77, C)
    return out


# --------------------------------------------------------------------------------- main

if __name__ == "__main__":
    # small shapes consistent with the module
    B = 2
    NUM_VOXELS = 128
    PATCH_SIZE = 16          # -> fmri_seq_len = num_patches = 8
    EMBED_DIM = 32           # fmri_latent_dim
    DEPTH = 2
    NUM_HEADS = 4
    MLP_RATIO = 4.0
    COND_DIM = 64

    key = jax.random.PRNGKey(0)
    pkey, xkey = jax.random.split(key)
    params = init_params(pkey, num_voxels=NUM_VOXELS, patch_size=PATCH_SIZE,
                         embed_dim=EMBED_DIM, depth=DEPTH, num_heads=NUM_HEADS,
                         mlp_ratio=MLP_RATIO, cond_dim=COND_DIM)
    x = jax.random.normal(xkey, (B, 1, NUM_VOXELS), _F32)

    # global_pool=False path (channel_mapper + dim_mapper)
    out = cond_stage_forward(params, x, num_heads=NUM_HEADS,
                             global_pool=False, ops=PALLAS_OPS)
    out = jax.block_until_ready(out)
    assert out.shape == (B, 77, COND_DIM), out.shape

    ref = cond_stage_forward(params, x, num_heads=NUM_HEADS,
                             global_pool=False, ops=REF_OPS)
    rel = float(jnp.max(jnp.abs(out - ref)) / (jnp.max(jnp.abs(ref)) + 1e-6))
    assert rel < 3e-2, f"pallas vs ref mismatch (rel={rel})"

    # global_pool=True path (mean pool -> final LN -> dim_mapper)
    out_gp = cond_stage_forward(params, x, num_heads=NUM_HEADS,
                                global_pool=True, ops=PALLAS_OPS)
    out_gp = jax.block_until_ready(out_gp)
    assert out_gp.shape == (B, 1, COND_DIM), out_gp.shape
    ref_gp = cond_stage_forward(params, x, num_heads=NUM_HEADS,
                                global_pool=True, ops=REF_OPS)
    rel_gp = float(jnp.max(jnp.abs(out_gp - ref_gp)) / (jnp.max(jnp.abs(ref_gp)) + 1e-6))
    assert rel_gp < 3e-2, f"pallas vs ref mismatch (rel={rel_gp})"

    print("KERNEL_OK")
</pallas_src>

<mosaic_0001>
module attributes {stable_mosaic.version = 11 : i64} {
  func.func @_patch_embed_kernel(%arg0: i32, %arg1: memref<1x8x16xf32, #tpu.memory_space<vmem>>, %arg2: memref<16x32xbf16, #tpu.memory_space<vmem>>, %arg3: memref<1x32xf32, #tpu.memory_space<vmem>>, %arg4: memref<1x8x32xf32, #tpu.memory_space<vmem>>, %arg5: memref<1x8x32xf32, #tpu.memory_space<vmem>>) attributes {dimension_semantics = [#tpu.dimension_semantics<parallel>], iteration_bounds = array<i64: 2>, scalar_prefetch = 0 : i64, scratch_operands = 0 : i64, tpu.core_type = #tpu.core_type<tc>, window_params = [{transform_indices = @transform_0, window_bounds = array<i64: 1, 8, 16>}, {pipeline_mode = #tpu.pipeline_mode<synchronous>, transform_indices = @transform_1, window_bounds = array<i64: 16, 32>}, {pipeline_mode = #tpu.pipeline_mode<synchronous>, transform_indices = @transform_2, window_bounds = array<i64: 1, 32>}, {pipeline_mode = #tpu.pipeline_mode<synchronous>, transform_indices = @transform_3, window_bounds = array<i64: 1, 8, 32>}, {transform_indices = @transform_4, window_bounds = array<i64: 1, 8, 32>}]} {
    %c0 = arith.constant 0 : index
    %c0_0 = arith.constant 0 : index
    %c0_1 = arith.constant 0 : index
    %0 = vector.load %arg1[%c0, %c0_0, %c0_1] : memref<1x8x16xf32, #tpu.memory_space<vmem>>, vector<1x8x16xf32>
    %1 = vector.shape_cast %0 : vector<1x8x16xf32> to vector<8x16xf32>
    %2 = arith.truncf %1 : vector<8x16xf32> to vector<8x16xbf16>
    %c0_2 = arith.constant 0 : index
    %c0_3 = arith.constant 0 : index
    %3 = vector.load %arg2[%c0_2, %c0_3] : memref<16x32xbf16, #tpu.memory_space<vmem>>, vector<16x32xbf16>
    %cst = arith.constant dense<0.000000e+00> : vector<8x32xf32>
    %4 = tpu.matmul %2, %3, %cst {dimension_numbers = #tpu.dot_dimension_numbers<[1], [0], [0], [1], [0, 0, 1, 1], [], []>} : vector<8x16xbf16>, vector<16x32xbf16>, vector<8x32xf32> -> vector<8x32xf32>
    %c0_4 = arith.constant 0 : index
    %c0_5 = arith.constant 0 : index
    %5 = vector.load %arg3[%c0_4, %c0_5] : memref<1x32xf32, #tpu.memory_space<vmem>>, vector<1x32xf32>
    %6 = vector.broadcast %5 : vector<1x32xf32> to vector<8x32xf32>
    %7 = arith.addf %4, %6 : vector<8x32xf32>
    %c0_6 = arith.constant 0 : index
    %c0_7 = arith.constant 0 : index
    %c0_8 = arith.constant 0 : index
    %8 = vector.load %arg4[%c0_6, %c0_7, %c0_8] : memref<1x8x32xf32, #tpu.memory_space<vmem>>, vector<1x8x32xf32>
    %9 = vector.shape_cast %8 : vector<1x8x32xf32> to vector<8x32xf32>
    %10 = arith.addf %7, %9 : vector<8x32xf32>
    %c0_9 = arith.constant 0 : index
    %c0_10 = arith.constant 0 : index
    %c0_11 = arith.constant 0 : index
    %11 = vector.load %arg5[%c0_9, %c0_10, %c0_11] : memref<1x8x32xf32, #tpu.memory_space<vmem>>, vector<1x8x32xf32>
    %12 = vector.shape_cast %11 : vector<1x8x32xf32> to vector<8x32xf32>
    %13 = vector.shape_cast %10 : vector<8x32xf32> to vector<1x8x32xf32>
    tpu.vector_store %arg5[%c0_9, %c0_10, %c0_11], %13 {strides = array<i32>} : memref<1x8x32xf32, #tpu.memory_space<vmem>>, vector<1x8x32xf32>,
    return
  }
  func.func @transform_0(%arg0: i32) -> (i32, i32, i32) {
    %c0_i32 = arith.constant 0 : i32
    %c0_i32_0 = arith.constant 0 : i32
    %c0_i32_1 = arith.constant 0 : i32
    return %arg0, %c0_i32, %c0_i32_0 : i32, i32, i32
  }
  func.func @transform_1(%arg0: i32) -> (i32, i32) {
    %c0_i32 = arith.constant 0 : i32
    %c0_i32_0 = arith.constant 0 : i32
    %c0_i32_1 = arith.constant 0 : i32
    return %c0_i32, %c0_i32_0 : i32, i32
  }
  func.func @transform_2(%arg0: i32) -> (i32, i32) {
    %c0_i32 = arith.constant 0 : i32
    %c0_i32_0 = arith.constant 0 : i32
    %c0_i32_1 = arith.constant 0 : i32
    return %c0_i32, %c0_i32_0 : i32, i32
  }
  func.func @transform_3(%arg0: i32) -> (i32, i32, i32) {
    %c0_i32 = arith.constant 0 : i32
    %c0_i32_0 = arith.constant 0 : i32
    %c0_i32_1 = arith.constant 0 : i32
    %c0_i32_2 = arith.constant 0 : i32
    return %c0_i32, %c0_i32_0, %c0_i32_1 : i32, i32, i32
  }
  func.func @transform_4(%arg0: i32) -> (i32, i32, i32) {
    %c0_i32 = arith.constant 0 : i32
    %c0_i32_0 = arith.constant 0 : i32
    %c0_i32_1 = arith.constant 0 : i32
    return %arg0, %c0_i32, %c0_i32_0 : i32, i32, i32
  }
}

</mosaic_0001>

<llo_original>
// kernel: tpu_custom_call.1
$region0: #{tpu_custom_call.1}
  #allocation0 [shape = 'u32[]', space=smem, size = 0x4, offset = 0x4, fixed_abs, tag = 'smem constant byte address 0x4 - core index']
  #allocation1 [shape = 'u32[72,128]{1,0:T(1,128)}', space=vmem, size = 0x9000, scoped, tag = 'internal scratch']
  %s0 = inlined_call_operand.hbm [shape: f32[2,8,16], index: 0, kind: input, shape index: {}]
  %s1 = inlined_call_operand.hbm [shape: bf16[16,32], index: 1, kind: input, shape index: {}]
  %s2 = inlined_call_operand.vmem [shape: f32[1,32], index: 2, kind: input, shape index: {}]
  %s3 = inlined_call_operand.hbm [shape: f32[1,8,32], index: 3, kind: input, shape index: {}]
  %s4 = inlined_call_operand.hbm [shape: f32[2,8,32], index: 4, kind: output, shape index: {}]
  %s5 = sld [smem:[#allocation0]]
  $region61: #{tpu_custom_call.1} parent=0
    _
  %s7 = ssub.s32 1, %s5
  %s8 = scalar_select 0, %s7, %s5
  $region1: #{tpu_custom_call.1} parent=0
    #allocation2 [shape = 'u8[8192]{0}', space=vmem, size = 0x2000, scoped, tag = 'input window, operand 0']
    #allocation3 [shape = 's32[2]{0}', space=sflag, size = 0x8, scoped, tag = 'scoped memory for tpu_custom_call.1']
    #allocation4 [shape = 's32[2]{0}', space=sflag, size = 0x8, scoped, tag = 'scoped memory for tpu_custom_call.1']
    #allocation5 [shape = 'u8[4096]{0}', space=vmem, size = 0x1000, scoped, tag = 'input window, operand 1, single buffered']
    #allocation6 [shape = 's32[1]{0}', space=sflag, size = 0x4, scoped, tag = 'scoped memory for tpu_custom_call.1']
    #allocation7 [shape = 'u8[4096]{0}', space=vmem, size = 0x1000, scoped, tag = 'input window, operand 3, single buffered']
    #allocation8 [shape = 'u8[8192]{0}', space=vmem, size = 0x2000, scoped, tag = 'output window, operand 0']
    %9 = vsyncpa [#allocation3], 0
    %s10 = scalar_lea.sflag [#allocation3], 1
    %11 = vsyncpa %s10, 0
    %12 = vsyncpa [#allocation6], 0
    %13 = vsyncpa [#allocation4], 0
    %s14 = scalar_lea.sflag [#allocation4], 1
    %15 = vsyncpa %s14, 0
    loop: start=0, step=1, limit=4
    $region2: #{tpu_custom_call.1} parent=1 // loop_pre_header
      _
    $region3: #{tpu_custom_call.1} parent=1 // loop_header
      %s17 = sphi 0, %s21
      %p18 = scmp.ge.s32.totalorder %s17, 4
      %s27 = sphi 0, %s29
      %s30 = sphi 0, %s27
      %s31 = sphi 0, %s30
      %s47 = sphi 0, %s31
      %s51 = sphi 0, %s51
      %s53 = sphi 0, %s51
      %s54 = sphi 0, %s53
      %s68 = sphi 0, %s54
      %s72 = sphi 0, %s72
      %s74 = sphi 0, %s72
      %s75 = sphi 0, %s74
      %s89 = sphi 0, %s75
      %s93 = sphi 0, %s93
      %s95 = sphi 0, %s93
      %s96 = sphi 0, %s95
      %s110 = sphi 0, %s96
      %s116 = sphi 0, %s118
      %s119 = sphi 0, %s116
      %s120 = sphi 0, %s119
      %s136 = sphi 0, %s120
    $region4: #{tpu_custom_call.1} parent=1 // loop_header_branch
      %20 = sbr.rel (%p18) target = $region8
    $region5: #{tpu_custom_call.1} parent=1 // loop_body
      %s22 = ssub.s32 %s17, 1
      %s23 = ssub.s32 %s17, 2
      %s24 = sadd.s32 %s17, 1
      %s25 = ssub.s32 %s17, %s24
      %p26 = scmp.eq.s32.totalorder %s25, 0
      %s28 = sadd.s32 %s27, 1
      %s29 = scalar_select %p26, %s27, %s28
      %p32 = pneg %p26
      %p33 = scmp.eq.s32.totalorder %s17, 1
      %p34 = por %p32, %p33
      %p35 = scmp.ne.s32.totalorder %s27, %s30
      %p36 = scmp.eq.s32.totalorder %s17, 0
      %p37 = por %p35, %p36
      %p38 = scmp.ne.s32.totalorder %s27, %s30
      %p39 = scmp.eq.s32.totalorder %s22, 1
      %p40 = por %p38, %p39
      %p41 = scmp.ne.s32.totalorder %s30, %s31
      %p42 = scmp.eq.s32.totalorder %s22, 0
      %p43 = por %p41, %p42
      %p44 = scmp.ne.s32.totalorder %s30, %s31
      %p45 = scmp.eq.s32.totalorder %s23, 1
      %p46 = por %p44, %p45
      %p48 = scmp.ne.s32.totalorder %s31, %s47
      %p49 = scmp.eq.s32.totalorder %s23, 0
      %p50 = por %p48, %p49
      %s52 = sadd.s32 %s51, 1
      %p55 = scmp.eq.s32.totalorder %s17, 1
      %p56 = scmp.ne.s32.totalorder %s51, %s53
      %p57 = scmp.eq.s32.totalorder %s17, 0
      %p58 = por %p56, %p57
      %p59 = scmp.ne.s32.totalorder %s51, %s53
      %p60 = scmp.eq.s32.totalorder %s22, 1
      %p61 = por %p59, %p60
      %p62 = scmp.ne.s32.totalorder %s53, %s54
      %p63 = scmp.eq.s32.totalorder %s22, 0
      %p64 = por %p62, %p63
      %p65 = scmp.ne.s32.totalorder %s53, %s54
      %p66 = scmp.eq.s32.totalorder %s23, 1
      %p67 = por %p65, %p66
      %p69 = scmp.ne.s32.totalorder %s54, %s68
      %p70 = scmp.eq.s32.totalorder %s23, 0
      %p71 = por %p69, %p70
      %s73 = sadd.s32 %s72, 1
      %p76 = scmp.eq.s32.totalorder %s17, 1
      %p77 = scmp.ne.s32.totalorder %s72, %s74
      %p78 = scmp.eq.s32.totalorder %s17, 0
      %p79 = por %p77, %p78
      %p80 = scmp.ne.s32.totalorder %s72, %s74
      %p81 = scmp.eq.s32.totalorder %s22, 1
      %p82 = por %p80, %p81
      %p83 = scmp.ne.s32.totalorder %s74, %s75
      %p84 = scmp.eq.s32.totalorder %s22, 0
      %p85 = por %p83, %p84
      %p86 = scmp.ne.s32.totalorder %s74, %s75
      %p87 = scmp.eq.s32.totalorder %s23, 1
      %p88 = por %p86, %p87
      %p90 = scmp.ne.s32.totalorder %s75, %s89
      %p91 = scmp.eq.s32.totalorder %s23, 0
      %p92 = por %p90, %p91
      %s94 = sadd.s32 %s93, 1
      %p97 = scmp.eq.s32.totalorder %s17, 1
      %p98 = scmp.ne.s32.totalorder %s93, %s95
      %p99 = scmp.eq.s32.totalorder %s17, 0
      %p100 = por %p98, %p99
      %p101 = scmp.ne.s32.totalorder %s93, %s95
      %p102 = scmp.eq.s32.totalorder %s22, 1
      %p103 = por %p101, %p102
      %p104 = scmp.ne.s32.totalorder %s95, %s96
      %p105 = scmp.eq.s32.totalorder %s22, 0
      %p106 = por %p104, %p105
      %p107 = scmp.ne.s32.totalorder %s95, %s96
      %p108 = scmp.eq.s32.totalorder %s23, 1
      %p109 = por %p107, %p108
      %p111 = scmp.ne.s32.totalorder %s96, %s110
      %p112 = scmp.eq.s32.totalorder %s23, 0
      %p113 = por %p111, %p112
      %s114 = ssub.s32 %s17, %s24
      %p115 = scmp.eq.s32.totalorder %s114, 0
      %s117 = sadd.s32 %s116, 1
      %s118 = scalar_select %p115, %s116, %s117
      %p121 = pneg %p115
      %p122 = scmp.eq.s32.totalorder %s17, 1
      %p123 = por %p121, %p122
      %p124 = scmp.ne.s32.totalorder %s116, %s119
      %p125 = scmp.eq.s32.totalorder %s17, 0
      %p126 = por %p124, %p125
      %p127 = scmp.ne.s32.totalorder %s116, %s119
      %p128 = scmp.eq.s32.totalorder %s22, 1
      %p129 = por %p127, %p128
      %p130 = scmp.ne.s32.totalorder %s119, %s120
      %p131 = scmp.eq.s32.totalorder %s22, 0
      %p132 = por %p130, %p131
      %p133 = scmp.ne.s32.totalorder %s119, %s120
      %p134 = scmp.eq.s32.totalorder %s23, 1
      %p135 = por %p133, %p134
      %p137 = scmp.ne.s32.totalorder %s120, %s136
      %p138 = scmp.eq.s32.totalorder %s23, 0
      %p139 = por %p137, %p138
      %p140 = scmp.le.s32.totalorder 1, %s17
      %p141 = scmp.lt.s32.totalorder %s17, 3
      %p142 = pnand %p140, %p141
      %p143 = pneg %p142
      // Predicated region
      $region9: #{tpu_custom_call.1} parent=5 // pred_check
        _
      $region10: #{tpu_custom_call.1} parent=5 // pred_check_branch
        %145 = sbr.rel (%p142) target = $region12
      $region11: #{tpu_custom_call.1} parent=5 // pred_region
        %s146 = ssub.s32 %s17, 1
        // Predicated region
        $region13: #{tpu_custom_call.1} parent=11 // pred_check
          %p147 = pneg %p64
        $region14: #{tpu_custom_call.1} parent=11 // pred_check_branch
          %149 = sbr.rel (%p147) target = $region16
        $region15: #{tpu_custom_call.1} parent=11 // pred_region
          %151 = vsyncadd [#allocation6], 0
          %s152 = sshll.u32 %s1, 4
          %s153 = int_to_ptr.hbm [resolvable:$true] %s152
          %s154 = sshll.u32 [#allocation5], 4
          %s155 = int_to_ptr.vmem [resolvable:$true] %s154
          %160 = dma.hbm_to_vmem [thread:$0]  %s153, 128, %s155, [#allocation6], 64, 64, 4
        $region16: #{tpu_custom_call.1} parent=11 // pred_fallthru
          _
        // Predicated region
        $region17: #{tpu_custom_call.1} parent=11 // pred_check
          %p161 = pneg %p85
        $region18: #{tpu_custom_call.1} parent=11 // pred_check_branch
          %163 = sbr.rel (%p161) target = $region20
        $region19: #{tpu_custom_call.1} parent=11 // pred_region
          _
        $region20: #{tpu_custom_call.1} parent=11 // pred_fallthru
          _
        // Predicated region
        $region21: #{tpu_custom_call.1} parent=11 // pred_check
          %p164 = pneg %p106
        $region22: #{tpu_custom_call.1} parent=11 // pred_check_branch
          %166 = sbr.rel (%p164) target = $region24
        $region23: #{tpu_custom_call.1} parent=11 // pred_region
          %168 = vsyncadd [#allocation6], 0
          %s170 = sshll.u32 %s3, 4
          %s171 = int_to_ptr.hbm [resolvable:$true] %s170
          %s172 = sshll.u32 [#allocation7], 4
          %s173 = int_to_ptr.vmem [resolvable:$true] %s172
          %175 = dma.hbm_to_vmem [thread:$0]  %s171, 128, %s173, [#allocation6]
        $region24: #{tpu_custom_call.1} parent=11 // pred_fallthru
          _
      $region12: #{tpu_custom_call.1} parent=5 // pred_fallthru
        _
      %p176 = scmp.lt.s32.totalorder %s17, 2
      // Predicated region
      $region25: #{tpu_custom_call.1} parent=5 // pred_check
        %p177 = pneg %p176
      $region26: #{tpu_custom_call.1} parent=5 // pred_check_branch
        %179 = sbr.rel (%p177) target = $region28
      $region27: #{tpu_custom_call.1} parent=5 // pred_region
        // Predicated region
        $region29: #{tpu_custom_call.1} parent=27 // pred_check
          %p180 = pneg %p37
        $region30: #{tpu_custom_call.1} parent=27 // pred_check_branch
          %182 = sbr.rel (%p180) target = $region32
        $region31: #{tpu_custom_call.1} parent=27 // pred_region
          %s183 = sand.u32 %s27, 1
          %s184 = scalar_lea.sflag [#allocation3], %s183
          %s185 = sand.u32 %s27, 1
          %s186 = smul.addr %s185, 8
          %s187 = scalar_lea.vmem [#allocation2], %s186
          %189 = vsyncadd %s184, 0
          %s190 = smul.addr %s17, 8
          %s191 = scalar_lea.hbm %s0, %s190
          %s193 = sshll.u32 %s191, 4
          %s194 = int_to_ptr.hbm [resolvable:$true] %s193
          %s195 = sshll.u32 %s187, 4
          %s196 = int_to_ptr.vmem [resolvable:$true] %s195
          %198 = dma.hbm_to_vmem [thread:$0]  %s194, 128, %s196, %s184
        $region32: #{tpu_custom_call.1} parent=27 // pred_fallthru
          _
      $region28: #{tpu_custom_call.1} parent=5 // pred_fallthru
        _
      %p199 = scmp.le.s32.totalorder 1, %s17
      %p200 = scmp.lt.s32.totalorder %s17, 3
      %p201 = pnand %p199, %p200
      %p202 = pneg %p201
      // Predicated region
      $region33: #{tpu_custom_call.1} parent=5 // pred_check
        _
      $region34: #{tpu_custom_call.1} parent=5 // pred_check_branch
        %204 = sbr.rel (%p201) target = $region36
      $region35: #{tpu_custom_call.1} parent=5 // pred_region
        %s205 = ssub.s32 %s17, 1
        %s206 = sand.u32 %s30, 1
        %s207 = scalar_lea.sflag [#allocation3], %s206
        %s208 = sand.u32 %s30, 1
        %s209 = smul.addr %s208, 8
        %s210 = scalar_lea.vmem [#allocation2], %s209
        // Predicated region
        $region37: #{tpu_custom_call.1} parent=35 // pred_check
          %p211 = pneg %p43
        $region38: #{tpu_custom_call.1} parent=35 // pred_check_branch
          %213 = sbr.rel (%p211) target = $region40
        $region39: #{tpu_custom_call.1} parent=35 // pred_region
          %215 = dma.done %s207, 128
        $region40: #{tpu_custom_call.1} parent=35 // pred_fallthru
          _
        // Predicated region
        $region41: #{tpu_custom_call.1} parent=35 // pred_check
          %p216 = pneg %p64
        $region42: #{tpu_custom_call.1} parent=35 // pred_check_branch
          %218 = sbr.rel (%p216) target = $region44
        $region43: #{tpu_custom_call.1} parent=35 // pred_region
          %220 = dma.done [#allocation6], 128
        $region44: #{tpu_custom_call.1} parent=35 // pred_fallthru
          _
        // Predicated region
        $region45: #{tpu_custom_call.1} parent=35 // pred_check
          %p221 = pneg %p106
        $region46: #{tpu_custom_call.1} parent=35 // pred_check_branch
          %223 = sbr.rel (%p221) target = $region48
        $region47: #{tpu_custom_call.1} parent=35 // pred_region
          %225 = dma.done [#allocation6], 128
        $region48: #{tpu_custom_call.1} parent=35 // pred_fallthru
          _
        %s226 = sand.u32 %s30, 1
        %s227 = scalar_lea.sflag [#allocation3], %s226
        %s228 = sand.u32 %s30, 1
        %s229 = smul.addr %s228, 8
        %s230 = scalar_lea.vmem [#allocation2], %s229
        %p231 = pneg %p43
        %p232 = pneg %p40
        %p233 = pneg %p64
        %p234 = pneg %p61
        %p235 = pneg %p85
        %p236 = pneg %p82
        %p237 = pneg %p106
        %p238 = pneg %p103
        %p239 = pneg %p132
        %p240 = pneg %p129
        %s241 = sand.u32 %s119, 1
        %s242 = scalar_lea.sflag [#allocation4], %s241
        %s243 = sand.u32 %s119, 1
        %s244 = smul.addr %s243, 8
        %s245 = scalar_lea.vmem [#allocation8], %s244
        %v247 = vld [vmem:[%s210] sm:$0xff]
        %v248 = vpack.c.bf16 %v247, %v247
        %v249 = vld [vmem:[#allocation5] sm:$0xf]
        %v250 = vld [vmem:[#allocation5 + $0x4] sm:$0xf]
        %v251 = vld [vmem:[%s2] sm:$0x1]
        %v253 = vperm.slane %v251, 0
        %v257 = vunpack.c.l.b16 %v249
        %v258 = vunpack.c.l.b16 %v250
        %v259 = vpack.c.b16 %v258, %v257
        %vm261 = vcmask 130048
        %v263 = vsel %vm261, %v248, 0
        %265 = vmatpush.bf16.msra.mxu0 0
        %266 = vmatpush.bf16.msra.mxu0 0
        %267 = vmatpush.bf16.msra.mxu0 0
        %268 = vmatpush.bf16.msra.mxu0 0
        %269 = vmatpush.bf16.msra.mxu0 0
        %270 = vmatpush.bf16.msra.mxu0 0
        %271 = vmatpush.bf16.msra.mxu0 0
        %272 = vmatpush.bf16.msra.mxu0 %v259
        %273 = vmatmul.bf16.gmra.mxu0 %v263
        %v274 = vpop.f32.mrf.mxu0
        %v275 = vadd.f32 %v253, %v274
        %v276 = vpop.f32.mrf.mxu0
        %277 = vdwg.mxu0
        %v278 = vld [vmem:[#allocation7] sm:$0xff]
        %v279 = vadd.f32 %v275, %v278
        %vm280 = vcmask 261120
        %281 = vst.msk [vmem:[%s245] sm:$0xff] %vm280, %v279
        %s282 = sand.u32 %s119, 1
        %s283 = scalar_lea.sflag [#allocation4], %s282
        %s284 = sand.u32 %s119, 1
        %s285 = smul.addr %s284, 8
        %s286 = scalar_lea.vmem [#allocation8], %s285
        // Predicated region
        $region49: #{tpu_custom_call.1} parent=35 // pred_check
          %p287 = pneg %p129
        $region50: #{tpu_custom_call.1} parent=35 // pred_check_branch
          %289 = sbr.rel (%p287) target = $region52
        $region51: #{tpu_custom_call.1} parent=35 // pred_region
          %291 = vsyncadd %s283, 0
          %s292 = smul.addr %s22, 8
          %s293 = scalar_lea.hbm %s4, %s292
          %s295 = sshll.u32 %s286, 4
          %s296 = int_to_ptr.vmem [resolvable:$true] %s295
          %s297 = sshll.u32 %s293, 4
          %s298 = int_to_ptr.hbm [resolvable:$true] %s297
          %300 = dma.vmem_to_hbm [thread:$0]  %s296, 128, %s298, %s283
        $region52: #{tpu_custom_call.1} parent=35 // pred_fallthru
          _
      $region36: #{tpu_custom_call.1} parent=5 // pred_fallthru
        _
      %p301 = scmp.le.s32.totalorder 2, %s17
      // Predicated region
      $region53: #{tpu_custom_call.1} parent=5 // pred_check
        %p302 = pneg %p301
      $region54: #{tpu_custom_call.1} parent=5 // pred_check_branch
        %304 = sbr.rel (%p302) target = $region56
      $region55: #{tpu_custom_call.1} parent=5 // pred_region
        %s305 = ssub.s32 %s17, 2
        // Predicated region
        $region57: #{tpu_custom_call.1} parent=55 // pred_check
          %p306 = pneg %p135
        $region58: #{tpu_custom_call.1} parent=55 // pred_check_branch
          %308 = sbr.rel (%p306) target = $region60
        $region59: #{tpu_custom_call.1} parent=55 // pred_region
          %s309 = sand.u32 %s120, 1
          %s310 = scalar_lea.sflag [#allocation4], %s309
          %s311 = sand.u32 %s120, 1
          %s312 = smul.addr %s311, 8
          %s313 = scalar_lea.vmem [#allocation8], %s312
          %315 = dma.done %s310, 128
        $region60: #{tpu_custom_call.1} parent=55 // pred_fallthru
          _
      $region56: #{tpu_custom_call.1} parent=5 // pred_fallthru
        _
    $region6: #{tpu_custom_call.1} parent=1 // loop_footer
      %s21 = sadd.s32 1, %s17
    $region7: #{tpu_custom_call.1} parent=1 // loop_footer_branch
      %16 = sbr.rel target = $region3
    $region8: #{tpu_custom_call.1} parent=1 // loop_exit
      _
    %316 = vsyncpa [#allocation3], 1
    %s317 = scalar_lea.sflag [#allocation3], 1
    %318 = vsyncpa %s317, 1
    %319 = vsyncpa [#allocation6], 1
    %320 = vsyncpa [#allocation4], 1
    %s321 = scalar_lea.sflag [#allocation4], 1
    %322 = vsyncpa %s321, 1

</llo_original>
